<compile_context>
chip_gen: v6e
topology: v6e:2x2x1
jax: 0.10.0
libtpu: 0.0.40
codegen_flags: <defaults>
</compile_context>

<pallas_src>
import jax
import jax.numpy as jnp
import numpy as np
from jax.experimental import pallas as pl
from jax.experimental.pallas import tpu as pltpu

EPS = 1e-5
_INV_SQRT2 = float(1.0 / np.sqrt(2.0))
_LANE = 128


def _upscale_kernel(x_ref, scale_ref, shift_ref, w_ref, o_ref):
    """One (batch, spatial-tile) grid step.

    x_ref:     (1, C_in, T)   input tile, channels on sublanes, spatial on lanes
    scale_ref: (1, C_in, 1)   gamma * rstd            (per batch & channel, f32)
    shift_ref: (1, C_in, 1)   beta - mean*gamma*rstd
    w_ref:     (K, C_in)      ConvTranspose2d weight, K = C_out*s*s, matmul dtype
    o_ref:     (1, K, T)      output tile (lane-dense: T is a multiple of 128)
    """
    x = x_ref[0].astype(jnp.float32)                         # (C_in, T)

    # InstanceNorm2d + affine, folded into one FMA (stats precomputed outside).
    xn = x * scale_ref[0] + shift_ref[0]

    # Exact (erf-based) GELU -- matches PyTorch default.
    g = 0.5 * xn * (1.0 + jax.lax.erf(xn * _INV_SQRT2))

    # ConvTranspose2d with kernel_size == stride: per-pixel matmul on the MXU.
    # (K, C_in) @ (C_in, T) -> (K, T), f32 accumulation.
    y = jnp.dot(w_ref[...], g.astype(w_ref.dtype),
                preferred_element_type=jnp.float32)
    o_ref[0] = y.astype(o_ref.dtype)


def _pick_tile_hw(hw, c_in, k, block_budget_bytes=16 * 1024 * 1024):
    """Largest multiple-of-128 spatial tile whose double-buffered x/out blocks fit."""
    per_row = 4 * (2 * c_in + 2 * k)            # f32 bytes per spatial row, x + out, 2 bufs
    cap = max(_LANE, (block_budget_bytes // per_row) // _LANE * _LANE)
    return int(hw if hw <= cap else cap)


def upscale_pallas(x_nchw, gamma, beta, weight, scale,
                   *, tile_hw=None, matmul_dtype=jnp.bfloat16):
    """x_nchw: (N, C_in, H, W); weight: (C_in, C_out, scale, scale) (PyTorch layout)."""
    N, C_in, H, W = x_nchw.shape
    C_out = weight.shape[1]
    HW = H * W
    K = C_out * scale * scale

    if tile_hw is None:
        tile_hw = _pick_tile_hw(HW, C_in, K)
    tile_hw = min(tile_hw, HW)
    num_tiles = pl.cdiv(HW, tile_hw)

    # ---- glue: layouts -------------------------------------------------------
    # Channels-first is already the layout we want: (N, C_in, HW), spatial on lanes.
    x_flat = x_nchw.reshape(N, C_in, HW)

    # Per-(n, c) instance-norm statistics: tiny XLA reduce (two-pass, f32 -- numerically
    # safe), folded into a single scale/shift so the kernel does one FMA per element.
    x32 = x_flat.astype(jnp.float32)
    mean = jnp.mean(x32, axis=2)                                   # (N, C_in)
    var = jnp.mean(jnp.square(x32 - mean[:, :, None]), axis=2)     # biased variance
    rstd = jax.lax.rsqrt(var + EPS)
    sc = gamma[None, :].astype(jnp.float32) * rstd                 # (N, C_in)
    sh = beta[None, :].astype(jnp.float32) - mean * sc
    sc = sc[:, :, None]                                            # (N, C_in, 1)
    sh = sh[:, :, None]

    # ConvTranspose2d weight (C_in, C_out, s, s) -> (K, C_in), rows ordered (o, kh, kw).
    w_t = jnp.transpose(weight, (1, 2, 3, 0)).reshape(K, C_in).astype(matmul_dtype)

    y_flat = pl.pallas_call(
        _upscale_kernel,
        out_shape=jax.ShapeDtypeStruct((N, K, HW), x_nchw.dtype),
        grid_spec=pltpu.PrefetchScalarGridSpec(
            num_scalar_prefetch=0,
            grid=(N, num_tiles),
            in_specs=[
                pl.BlockSpec((1, C_in, tile_hw), lambda n, t: (n, 0, t)),
                pl.BlockSpec((1, C_in, 1), lambda n, t: (n, 0, 0)),
                pl.BlockSpec((1, C_in, 1), lambda n, t: (n, 0, 0)),
                pl.BlockSpec((K, C_in), lambda n, t: (0, 0)),   # weight resident in VMEM
            ],
            out_specs=pl.BlockSpec((1, K, tile_hw), lambda n, t: (n, 0, t)),
        ),
        compiler_params=pltpu.CompilerParams(
            # Stats are precomputed, so every (n, tile) step is independent:
            # both axes parallel -> both v7x TensorCores busy even at N == 1.
            dimension_semantics=("parallel", "parallel"),
            # Block working set is capped at ~16 MiB by _pick_tile_hw; 48 MiB leaves
            # headroom for the resident weight + in-kernel temporaries while staying
            # under v7x's 64 MiB physical VMEM (and well under v5e/v6e's 128 MiB).
            vmem_limit_bytes=48 * 1024 * 1024,
        ),
    )(x_flat, sc, sh, w_t)

    # ---- glue: depth-to-space, (N, K, HW) -> (N, C_out, H*s, W*s) ------------
    # Stays in XLA; if the consumer accepts the (N, C_out*s*s, H, W) layout this
    # transpose can be dropped entirely.
    y = y_flat.reshape(N, C_out, scale, scale, H, W)
    y = jnp.transpose(y, (0, 1, 4, 2, 5, 3))        # (N, C_out, H, s, W, s)
    return y.reshape(N, C_out, H * scale, W * scale)


def upscale_reference(x_nchw, gamma, beta, weight, scale):
    """Pure-JAX reference of the PyTorch forward (for verification)."""
    x = x_nchw.astype(jnp.float32)
    mean = jnp.mean(x, axis=(2, 3), keepdims=True)
    var = jnp.mean((x - mean) ** 2, axis=(2, 3), keepdims=True)
    xn = (x - mean) * jax.lax.rsqrt(var + EPS)
    xn = xn * gamma[None, :, None, None] + beta[None, :, None, None]
    g = 0.5 * xn * (1.0 + jax.lax.erf(xn / jnp.sqrt(2.0)))
    N, C_in, H, W = x.shape
    C_out = weight.shape[1]
    # out[n,o,h*s+kh,w*s+kw] = sum_c g[n,c,h,w] * W[c,o,kh,kw]
    y = jnp.einsum("nchw,cokl->nohkwl", g, weight)
    return y.reshape(N, C_out, H * scale, W * scale)


if __name__ == "__main__":
    # Small deterministic example: batch=2, in_c=4, out_c=8, spatial 16x16, scale=2
    N, C_in, C_out, H, W, scale = 2, 4, 8, 16, 16, 2

    key = jax.random.PRNGKey(0)
    kx, kg, kb, kw = jax.random.split(key, 4)
    x = jax.random.normal(kx, (N, C_in, H, W), dtype=jnp.float32)
    gamma = 1.0 + 0.1 * jax.random.normal(kg, (C_in,), dtype=jnp.float32)
    beta = 0.1 * jax.random.normal(kb, (C_in,), dtype=jnp.float32)
    weight = 0.1 * jax.random.normal(kw, (C_in, C_out, scale, scale), dtype=jnp.float32)

    ref = upscale_reference(x, gamma, beta, weight, scale)

    # f32 matmul path with an explicit small tile so the multi-tile spatial grid
    # (grid=(N, 2)) is exercised; checked tightly against the reference.
    out_f32 = upscale_pallas(x, gamma, beta, weight, scale,
                             tile_hw=128, matmul_dtype=jnp.float32)
    out_f32 = jax.block_until_ready(out_f32)
    np.testing.assert_allclose(np.asarray(out_f32), np.asarray(ref),
                               rtol=1e-4, atol=1e-4)

    # Default path: bf16 MXU operands (v6e/v7x fast path), auto tile size.
    out_bf16 = upscale_pallas(x, gamma, beta, weight, scale)
    out_bf16 = jax.block_until_ready(out_bf16)
    np.testing.assert_allclose(np.asarray(out_bf16), np.asarray(ref),
                               rtol=3e-2, atol=3e-2)

    assert out_f32.shape == (N, C_out, H * scale, W * scale)
    print("KERNEL_OK")
</pallas_src>

<mosaic_0001>
module attributes {stable_mosaic.version = 11 : i64} {
  func.func @_upscale_kernel(%arg0: i32, %arg1: i32, %arg2: memref<1x4x128xf32, #tpu.memory_space<vmem>>, %arg3: memref<1x4x1xf32, #tpu.memory_space<vmem>>, %arg4: memref<1x4x1xf32, #tpu.memory_space<vmem>>, %arg5: memref<32x4xf32, #tpu.memory_space<vmem>>, %arg6: memref<1x32x128xf32, #tpu.memory_space<vmem>>) attributes {dimension_semantics = [#tpu.dimension_semantics<parallel>, #tpu.dimension_semantics<parallel>], iteration_bounds = array<i64: 2, 2>, scalar_prefetch = 0 : i64, scratch_operands = 0 : i64, tpu.core_type = #tpu.core_type<tc>, window_params = [{transform_indices = @transform_0, window_bounds = array<i64: 1, 4, 128>}, {transform_indices = @transform_1, window_bounds = array<i64: 1, 4, 1>}, {transform_indices = @transform_2, window_bounds = array<i64: 1, 4, 1>}, {pipeline_mode = #tpu.pipeline_mode<synchronous>, transform_indices = @transform_3, window_bounds = array<i64: 32, 4>}, {transform_indices = @transform_4, window_bounds = array<i64: 1, 32, 128>}]} {
    %c0 = arith.constant 0 : index
    %c0_0 = arith.constant 0 : index
    %c0_1 = arith.constant 0 : index
    %0 = vector.load %arg2[%c0, %c0_0, %c0_1] : memref<1x4x128xf32, #tpu.memory_space<vmem>>, vector<1x4x128xf32>
    %1 = vector.shape_cast %0 : vector<1x4x128xf32> to vector<4x128xf32>
    %c0_2 = arith.constant 0 : index
    %c0_3 = arith.constant 0 : index
    %c0_4 = arith.constant 0 : index
    %2 = vector.load %arg3[%c0_2, %c0_3, %c0_4] : memref<1x4x1xf32, #tpu.memory_space<vmem>>, vector<1x4x1xf32>
    %3 = vector.shape_cast %2 : vector<1x4x1xf32> to vector<4x1xf32>
    %4 = vector.broadcast %3 : vector<4x1xf32> to vector<4x128xf32>
    %5 = arith.mulf %1, %4 : vector<4x128xf32>
    %c0_5 = arith.constant 0 : index
    %c0_6 = arith.constant 0 : index
    %c0_7 = arith.constant 0 : index
    %6 = vector.load %arg4[%c0_5, %c0_6, %c0_7] : memref<1x4x1xf32, #tpu.memory_space<vmem>>, vector<1x4x1xf32>
    %7 = vector.shape_cast %6 : vector<1x4x1xf32> to vector<4x1xf32>
    %8 = vector.broadcast %7 : vector<4x1xf32> to vector<4x128xf32>
    %9 = arith.addf %5, %8 : vector<4x128xf32>
    %cst = arith.constant 5.000000e-01 : f32
    %10 = vector.broadcast %cst : f32 to vector<4x128xf32>
    %11 = arith.mulf %10, %9 : vector<4x128xf32>
    %cst_8 = arith.constant 0.707106769 : f32
    %12 = vector.broadcast %cst_8 : f32 to vector<4x128xf32>
    %13 = arith.mulf %9, %12 : vector<4x128xf32>
    %14 = math.erf %13 : vector<4x128xf32>
    %cst_9 = arith.constant 1.000000e+00 : f32
    %15 = vector.broadcast %cst_9 : f32 to vector<4x128xf32>
    %16 = arith.addf %15, %14 : vector<4x128xf32>
    %17 = arith.mulf %11, %16 : vector<4x128xf32>
    %c0_10 = arith.constant 0 : index
    %c0_11 = arith.constant 0 : index
    %18 = vector.load %arg5[%c0_10, %c0_11] : memref<32x4xf32, #tpu.memory_space<vmem>>, vector<32x4xf32>
    %cst_12 = arith.constant dense<0.000000e+00> : vector<32x128xf32>
    %19 = tpu.matmul %18, %17, %cst_12 {dimension_numbers = #tpu.dot_dimension_numbers<[1], [0], [0], [1], [0, 0, 1, 1], [], []>} : vector<32x4xf32>, vector<4x128xf32>, vector<32x128xf32> -> vector<32x128xf32>
    %c0_13 = arith.constant 0 : index
    %c0_14 = arith.constant 0 : index
    %c0_15 = arith.constant 0 : index
    %20 = vector.load %arg6[%c0_13, %c0_14, %c0_15] : memref<1x32x128xf32, #tpu.memory_space<vmem>>, vector<1x32x128xf32>
    %21 = vector.shape_cast %20 : vector<1x32x128xf32> to vector<32x128xf32>
    %22 = vector.shape_cast %19 : vector<32x128xf32> to vector<1x32x128xf32>
    tpu.vector_store %arg6[%c0_13, %c0_14, %c0_15], %22 {strides = array<i32>} : memref<1x32x128xf32, #tpu.memory_space<vmem>>, vector<1x32x128xf32>,
    return
  }
  func.func @transform_0(%arg0: i32, %arg1: i32) -> (i32, i32, i32) {
    %c0_i32 = arith.constant 0 : i32
    %c0_i32_0 = arith.constant 0 : i32
    return %arg0, %c0_i32, %arg1 : i32, i32, i32
  }
  func.func @transform_1(%arg0: i32, %arg1: i32) -> (i32, i32, i32) {
    %c0_i32 = arith.constant 0 : i32
    %c0_i32_0 = arith.constant 0 : i32
    %c0_i32_1 = arith.constant 0 : i32
    return %arg0, %c0_i32, %c0_i32_0 : i32, i32, i32
  }
  func.func @transform_2(%arg0: i32, %arg1: i32) -> (i32, i32, i32) {
    %c0_i32 = arith.constant 0 : i32
    %c0_i32_0 = arith.constant 0 : i32
    %c0_i32_1 = arith.constant 0 : i32
    return %arg0, %c0_i32, %c0_i32_0 : i32, i32, i32
  }
  func.func @transform_3(%arg0: i32, %arg1: i32) -> (i32, i32) {
    %c0_i32 = arith.constant 0 : i32
    %c0_i32_0 = arith.constant 0 : i32
    %c0_i32_1 = arith.constant 0 : i32
    return %c0_i32, %c0_i32_0 : i32, i32
  }
  func.func @transform_4(%arg0: i32, %arg1: i32) -> (i32, i32, i32) {
    %c0_i32 = arith.constant 0 : i32
    %c0_i32_0 = arith.constant 0 : i32
    return %arg0, %c0_i32, %arg1 : i32, i32, i32
  }
}

</mosaic_0001>

<llo_original>
// kernel: tpu_custom_call.1
$region0: #{tpu_custom_call.1}
  #allocation0 [shape = 'u32[]', space=smem, size = 0x4, offset = 0x4, fixed_abs, tag = 'smem constant byte address 0x4 - core index']
  #allocation1 [shape = 'u32[144,128]{1,0:T(1,128)}', space=vmem, size = 0x12000, scoped, tag = 'internal scratch']
  %s0 = inlined_call_operand.vmem [shape: f32[2,4,256], index: 0, kind: input, shape index: {}]
  %s1 = inlined_call_operand.vmem [shape: f32[2,4,1], index: 1, kind: input, shape index: {}]
  %s2 = inlined_call_operand.vmem [shape: f32[2,4,1], index: 2, kind: input, shape index: {}]
  %s3 = inlined_call_operand.vmem [shape: f32[32,4], index: 3, kind: input, shape index: {}]
  %s4 = inlined_call_operand.hbm [shape: f32[2,32,256], index: 4, kind: output, shape index: {}]
  %s5 = sld [smem:[#allocation0]]
  $region49: #{tpu_custom_call.1} parent=0
    _
  %s7 = ssub.s32 1, %s5
  %s8 = scalar_select 0, %s7, %s5
  $region1: #{tpu_custom_call.1} parent=0
    #allocation2 [shape = 'u8[32768]{0}', space=vmem, size = 0x8000, scoped, tag = 'output window, operand 0']
    #allocation3 [shape = 's32[2]{0}', space=sflag, size = 0x8, scoped, tag = 'scoped memory for tpu_custom_call.1']
    %9 = vsyncpa [#allocation3], 0
    %s10 = scalar_lea.sflag [#allocation3], 1
    %11 = vsyncpa %s10, 0
    loop: start=0, step=1, limit=6
    $region2: #{tpu_custom_call.1} parent=1 // loop_pre_header
      _
    $region3: #{tpu_custom_call.1} parent=1 // loop_header
      %s13 = sphi 0, %s17
      %p14 = scmp.ge.s32.totalorder %s13, 6
      %s20 = sphi 0, %s32
      %s21 = sphi 0, %s28
      %s22 = sphi 0, %s20
      %s23 = sphi 0, %s21
      %s24 = sphi 0, %s22
      %s25 = sphi 0, %s23
      %s37 = sphi 0, %s39
      %s40 = sphi 0, %s37
      %s41 = sphi 0, %s40
      %s57 = sphi 0, %s41
      %s63 = sphi 0, %s65
      %s66 = sphi 0, %s63
      %s67 = sphi 0, %s66
      %s83 = sphi 0, %s67
      %s89 = sphi 0, %s91
      %s92 = sphi 0, %s89
      %s93 = sphi 0, %s92
      %s109 = sphi 0, %s93
      %s113 = sphi 0, %s113
      %s115 = sphi 0, %s113
      %s116 = sphi 0, %s115
      %s130 = sphi 0, %s116
      %s138 = sphi 0, %s140
      %s141 = sphi 0, %s138
      %s142 = sphi 0, %s141
      %s158 = sphi 0, %s142
    $region4: #{tpu_custom_call.1} parent=1 // loop_header_branch
      %16 = sbr.rel (%p14) target = $region8
    $region5: #{tpu_custom_call.1} parent=1 // loop_body
      %s18 = ssub.s32 %s13, 1
      %s19 = ssub.s32 %s13, 2
      %s26 = sadd.s32 1, %s21
      %p27 = scmp.ge.s32.totalorder %s26, 2
      %s28 = scalar_select %p27, 0, %s26
      %s29 = sadd.s32 1, %s20
      %s30 = scalar_select %p27, %s29, %s20
      %p31 = scmp.ge.s32.totalorder %s30, 2
      %s32 = scalar_select %p31, 0, %s30
      %s33 = ssub.s32 %s20, %s32
      %s34 = ssub.s32 %s21, %s28
      %s35 = sor.u32 %s33, %s34
      %p36 = scmp.eq.s32.totalorder %s35, 0
      %s38 = sadd.s32 %s37, 1
      %s39 = scalar_select %p36, %s37, %s38
      %p42 = pneg %p36
      %p43 = scmp.eq.s32.totalorder %s13, 3
      %p44 = por %p42, %p43
      %p45 = scmp.ne.s32.totalorder %s37, %s40
      %p46 = scmp.eq.s32.totalorder %s13, 0
      %p47 = por %p45, %p46
      %p48 = scmp.ne.s32.totalorder %s37, %s40
      %p49 = scmp.eq.s32.totalorder %s18, 3
      %p50 = por %p48, %p49
      %p51 = scmp.ne.s32.totalorder %s40, %s41
      %p52 = scmp.eq.s32.totalorder %s18, 0
      %p53 = por %p51, %p52
      %p54 = scmp.ne.s32.totalorder %s40, %s41
      %p55 = scmp.eq.s32.totalorder %s19, 3
      %p56 = por %p54, %p55
      %p58 = scmp.ne.s32.totalorder %s41, %s57
      %p59 = scmp.eq.s32.totalorder %s19, 0
      %p60 = por %p58, %p59
      %s61 = ssub.s32 %s20, %s32
      %p62 = scmp.eq.s32.totalorder %s61, 0
      %s64 = sadd.s32 %s63, 1
      %s65 = scalar_select %p62, %s63, %s64
      %p68 = pneg %p62
      %p69 = scmp.eq.s32.totalorder %s13, 3
      %p70 = por %p68, %p69
      %p71 = scmp.ne.s32.totalorder %s63, %s66
      %p72 = scmp.eq.s32.totalorder %s13, 0
      %p73 = por %p71, %p72
      %p74 = scmp.ne.s32.totalorder %s63, %s66
      %p75 = scmp.eq.s32.totalorder %s18, 3
      %p76 = por %p74, %p75
      %p77 = scmp.ne.s32.totalorder %s66, %s67
      %p78 = scmp.eq.s32.totalorder %s18, 0
      %p79 = por %p77, %p78
      %p80 = scmp.ne.s32.totalorder %s66, %s67
      %p81 = scmp.eq.s32.totalorder %s19, 3
      %p82 = por %p80, %p81
      %p84 = scmp.ne.s32.totalorder %s67, %s83
      %p85 = scmp.eq.s32.totalorder %s19, 0
      %p86 = por %p84, %p85
      %s87 = ssub.s32 %s20, %s32
      %p88 = scmp.eq.s32.totalorder %s87, 0
      %s90 = sadd.s32 %s89, 1
      %s91 = scalar_select %p88, %s89, %s90
      %p94 = pneg %p88
      %p95 = scmp.eq.s32.totalorder %s13, 3
      %p96 = por %p94, %p95
      %p97 = scmp.ne.s32.totalorder %s89, %s92
      %p98 = scmp.eq.s32.totalorder %s13, 0
      %p99 = por %p97, %p98
      %p100 = scmp.ne.s32.totalorder %s89, %s92
      %p101 = scmp.eq.s32.totalorder %s18, 3
      %p102 = por %p100, %p101
      %p103 = scmp.ne.s32.totalorder %s92, %s93
      %p104 = scmp.eq.s32.totalorder %s18, 0
      %p105 = por %p103, %p104
      %p106 = scmp.ne.s32.totalorder %s92, %s93
      %p107 = scmp.eq.s32.totalorder %s19, 3
      %p108 = por %p106, %p107
      %p110 = scmp.ne.s32.totalorder %s93, %s109
      %p111 = scmp.eq.s32.totalorder %s19, 0
      %p112 = por %p110, %p111
      %s114 = sadd.s32 %s113, 1
      %p117 = scmp.eq.s32.totalorder %s13, 3
      %p118 = scmp.ne.s32.totalorder %s113, %s115
      %p119 = scmp.eq.s32.totalorder %s13, 0
      %p120 = por %p118, %p119
      %p121 = scmp.ne.s32.totalorder %s113, %s115
      %p122 = scmp.eq.s32.totalorder %s18, 3
      %p123 = por %p121, %p122
      %p124 = scmp.ne.s32.totalorder %s115, %s116
      %p125 = scmp.eq.s32.totalorder %s18, 0
      %p126 = por %p124, %p125
      %p127 = scmp.ne.s32.totalorder %s115, %s116
      %p128 = scmp.eq.s32.totalorder %s19, 3
      %p129 = por %p127, %p128
      %p131 = scmp.ne.s32.totalorder %s116, %s130
      %p132 = scmp.eq.s32.totalorder %s19, 0
      %p133 = por %p131, %p132
      %s134 = ssub.s32 %s20, %s32
      %s135 = ssub.s32 %s21, %s28
      %s136 = sor.u32 %s134, %s135
      %p137 = scmp.eq.s32.totalorder %s136, 0
      %s139 = sadd.s32 %s138, 1
      %s140 = scalar_select %p137, %s138, %s139
      %p143 = pneg %p137
      %p144 = scmp.eq.s32.totalorder %s13, 3
      %p145 = por %p143, %p144
      %p146 = scmp.ne.s32.totalorder %s138, %s141
      %p147 = scmp.eq.s32.totalorder %s13, 0
      %p148 = por %p146, %p147
      %p149 = scmp.ne.s32.totalorder %s138, %s141
      %p150 = scmp.eq.s32.totalorder %s18, 3
      %p151 = por %p149, %p150
      %p152 = scmp.ne.s32.totalorder %s141, %s142
      %p153 = scmp.eq.s32.totalorder %s18, 0
      %p154 = por %p152, %p153
      %p155 = scmp.ne.s32.totalorder %s141, %s142
      %p156 = scmp.eq.s32.totalorder %s19, 3
      %p157 = por %p155, %p156
      %p159 = scmp.ne.s32.totalorder %s142, %s158
      %p160 = scmp.eq.s32.totalorder %s19, 0
      %p161 = por %p159, %p160
      %p162 = scmp.le.s32.totalorder 1, %s13
      %p163 = scmp.lt.s32.totalorder %s13, 5
      %p164 = pnand %p162, %p163
      %p165 = pneg %p164
      // Predicated region
      $region9: #{tpu_custom_call.1} parent=5 // pred_check
        _
      $region10: #{tpu_custom_call.1} parent=5 // pred_check_branch
        %167 = sbr.rel (%p164) target = $region12
      $region11: #{tpu_custom_call.1} parent=5 // pred_region
        %s168 = ssub.s32 %s13, 1
        // Predicated region
        $region13: #{tpu_custom_call.1} parent=11 // pred_check
          %p169 = pneg %p126
        $region14: #{tpu_custom_call.1} parent=11 // pred_check_branch
          %171 = sbr.rel (%p169) target = $region16
        $region15: #{tpu_custom_call.1} parent=11 // pred_region
          _
        $region16: #{tpu_custom_call.1} parent=11 // pred_fallthru
          _
      $region12: #{tpu_custom_call.1} parent=5 // pred_fallthru
        _
      %p172 = scmp.lt.s32.totalorder %s13, 4
      // Predicated region
      $region17: #{tpu_custom_call.1} parent=5 // pred_check
        %p173 = pneg %p172
      $region18: #{tpu_custom_call.1} parent=5 // pred_check_branch
        %175 = sbr.rel (%p173) target = $region20
      $region19: #{tpu_custom_call.1} parent=5 // pred_region
        // Predicated region
        $region21: #{tpu_custom_call.1} parent=19 // pred_check
          %p176 = pneg %p47
        $region22: #{tpu_custom_call.1} parent=19 // pred_check_branch
          %178 = sbr.rel (%p176) target = $region24
        $region23: #{tpu_custom_call.1} parent=19 // pred_region
          %p179 = scmp.lt.s32.totalorder %s20, 1
          %s180 = scalar_select %p179, %s20, 1
          %p181 = scmp.lt.s32.totalorder %s21, 1
          %s182 = scalar_select %p181, %s21, 1
          %s183 = smul.addr %s180, 2
          %s184 = sadd.s32 %s182, %s183
          %s185 = smul.addr %s184, 4
          %s186 = scalar_lea.vmem %s0, %s185
        $region24: #{tpu_custom_call.1} parent=19 // pred_fallthru
          _
        // Predicated region
        $region25: #{tpu_custom_call.1} parent=19 // pred_check
          %p187 = pneg %p73
        $region26: #{tpu_custom_call.1} parent=19 // pred_check_branch
          %189 = sbr.rel (%p187) target = $region28
        $region27: #{tpu_custom_call.1} parent=19 // pred_region
          %p190 = scmp.lt.s32.totalorder %s20, 1
          %s191 = scalar_select %p190, %s20, 1
          %s192 = smul.addr %s191, 4
          %s193 = scalar_lea.vmem %s1, %s192
        $region28: #{tpu_custom_call.1} parent=19 // pred_fallthru
          _
        // Predicated region
        $region29: #{tpu_custom_call.1} parent=19 // pred_check
          %p194 = pneg %p99
        $region30: #{tpu_custom_call.1} parent=19 // pred_check_branch
          %196 = sbr.rel (%p194) target = $region32
        $region31: #{tpu_custom_call.1} parent=19 // pred_region
          %p197 = scmp.lt.s32.totalorder %s20, 1
          %s198 = scalar_select %p197, %s20, 1
          %s199 = smul.addr %s198, 4
          %s200 = scalar_lea.vmem %s2, %s199
        $region32: #{tpu_custom_call.1} parent=19 // pred_fallthru
          _
      $region20: #{tpu_custom_call.1} parent=5 // pred_fallthru
        _
      %p201 = scmp.le.s32.totalorder 1, %s13
      %p202 = scmp.lt.s32.totalorder %s13, 5
      %p203 = pnand %p201, %p202
      %p204 = pneg %p203
      // Predicated region
      $region33: #{tpu_custom_call.1} parent=5 // pred_check
        _
      $region34: #{tpu_custom_call.1} parent=5 // pred_check_branch
        %206 = sbr.rel (%p203) target = $region36
      $region35: #{tpu_custom_call.1} parent=5 // pred_region
        %s207 = ssub.s32 %s13, 1
        %p208 = scmp.lt.s32.totalorder %s22, 1
        %s209 = scalar_select %p208, %s22, 1
        %p210 = scmp.lt.s32.totalorder %s23, 1
        %s211 = scalar_select %p210, %s23, 1
        %s212 = smul.addr %s209, 2
        %s213 = sadd.s32 %s211, %s212
        %s214 = smul.addr %s213, 4
        %s215 = scalar_lea.vmem %s0, %s214
        %p216 = pneg %p53
        %p217 = pneg %p50
        %p218 = scmp.lt.s32.totalorder %s22, 1
        %s219 = scalar_select %p218, %s22, 1
        %s220 = smul.addr %s219, 4
        %s221 = scalar_lea.vmem %s1, %s220
        %p222 = pneg %p79
        %p223 = pneg %p76
        %p224 = scmp.lt.s32.totalorder %s22, 1
        %s225 = scalar_select %p224, %s22, 1
        %s226 = smul.addr %s225, 4
        %s227 = scalar_lea.vmem %s2, %s226
        %p228 = pneg %p105
        %p229 = pneg %p102
        %p230 = pneg %p126
        %p231 = pneg %p123
        %p232 = pneg %p154
        %p233 = pneg %p151
        %s234 = sand.u32 %s141, 1
        %s235 = scalar_lea.sflag [#allocation3], %s234
        %s236 = sand.u32 %s141, 1
        %s237 = smul.addr %s236, 32
        %s238 = scalar_lea.vmem [#allocation2], %s237
        %p239 = scmp.lt.s32.totalorder %s22, 1
        %s240 = scalar_select %p239, %s22, 1
        %p241 = scmp.lt.s32.totalorder %s23, 1
        %s242 = scalar_select %p241, %s23, 1
        %s243 = smul.addr %s240, 2
        %s244 = sadd.s32 %s242, %s243
        %s245 = smul.addr %s244, 4
        %s246 = scalar_lea.vmem %s0, %s245
        %p247 = scmp.lt.s32.totalorder %s22, 1
        %s248 = scalar_select %p247, %s22, 1
        %s249 = smul.addr %s248, 4
        %s250 = scalar_lea.vmem %s1, %s249
        %p251 = scmp.lt.s32.totalorder %s22, 1
        %s252 = scalar_select %p251, %s22, 1
        %s253 = smul.addr %s252, 4
        %s254 = scalar_lea.vmem %s2, %s253
        %v255 = vld [vmem:[%s246] sm:$0xf]
        %v256 = vld [vmem:[%s250] sm:$0xf]
        %258 = vset.pattern.permute.xlu0 0
        %259 = vperm.xlu0 %258, %v256
        %v260 = vpop.permute.xlu0 %259
        %v262 = vmul.f32 %v255, %v260
        %v263 = vld [vmem:[%s254] sm:$0xf]
        %265 = vset.pattern.permute.xlu0 0
        %266 = vperm.xlu0 %265, %v263
        %v267 = vpop.permute.xlu0 %266
        %v269 = vadd.f32 %v262, %v267
        %v270 = vmul.f32 %v269, 0.5
        %v271 = vmul.f32 %v269, 0.70710677
        %v272 = verf.f32.pop %v271
        %v273 = vadd.f32 %v272, 1.0
        %v274 = vmul.f32 %v270, %v273
        %v275 = vld [vmem:[%s3] sm:$0xff]
        %v276 = vld [vmem:[%s3 + $0x8] sm:$0xff]
        %v277 = vld [vmem:[%s3 + $0x10] sm:$0xff]
        %v278 = vld [vmem:[%s3 + $0x18] sm:$0xff]
        %vm279 = vcmask 31744
        %v281 = vsel %vm279, %v275, 0
        %v284 = vsel %vm279, %v276, 0
        %v287 = vsel %vm279, %v277, 0
        %v290 = vsel %vm279, %v278, 0
        %vm292 = vcmask 1043456
        %v294 = vsel %vm292, %v274, 0
        %296 = vmatprep.subr.mxu0 0.0
        %297 = vmatpush1.msra.mxu0 0.0
        %298 = vmatprep.subr.mxu0 0.0
        %299 = vmatpush1.msra.mxu0 0.0
        %300 = vmatprep.subr.mxu0 0.0
        %301 = vmatpush1.msra.mxu0 0.0
        %302 = vmatprep.subr.mxu0 0.0
        %303 = vmatpush1.msra.mxu0 0.0
        %304 = vmatprep.subr.mxu0 0.0
        %305 = vmatpush1.msra.mxu0 0.0
        %306 = vmatprep.subr.mxu0 0.0
        %307 = vmatpush1.msra.mxu0 0.0
        %308 = vmatprep.subr.mxu0 0.0
        %309 = vmatpush1.msra.mxu0 0.0
        %310 = vmatprep.subr.mxu0 0.0
        %311 = vmatpush1.msra.mxu0 0.0
        %312 = vmatprep.subr.mxu0 0.0
        %313 = vmatpush1.msra.mxu0 0.0
        %314 = vmatprep.subr.mxu0 0.0
        %315 = vmatpush1.msra.mxu0 0.0
        %316 = vmatprep.subr.mxu0 0.0
        %317 = vmatpush1.msra.mxu0 0.0
        %318 = vmatprep.subr.mxu0 0.0
        %319 = vmatpush1.msra.mxu0 0.0
        %320 = vmatprep.subr.mxu0 0.0
        %321 = vmatpush1.msra.mxu0 0.0
        %322 = vmatprep.subr.mxu0 0.0
        %323 = vmatpush1.msra.mxu0 0.0
        %324 = vmatprep.subr.mxu0 0.0
        %325 = vmatpush1.msra.mxu0 0.0
        %326 = vmatprep.subr.mxu0 0.0
        %327 = vmatpush1.msra.mxu0 %v294
        %328 = vmatprep.subr.mxu0 0.0
        %329 = vmatpush2.msra.mxu0 0.0
        %330 = vmatprep.subr.mxu0 0.0
        %331 = vmatpush2.msra.mxu0 0.0
        %332 = vmatprep.subr.mxu0 0.0
        %333 = vmatpush2.msra.mxu0 0.0
        %334 = vmatprep.subr.mxu0 0.0
        %335 = vmatpush2.msra.mxu0 0.0
        %336 = vmatprep.subr.mxu0 0.0
        %337 = vmatpush2.msra.mxu0 0.0
        %338 = vmatprep.subr.mxu0 0.0
        %339 = vmatpush2.msra.mxu0 0.0
        %340 = vmatprep.subr.mxu0 0.0
        %341 = vmatpush2.msra.mxu0 0.0
        %342 = vmatprep.subr.mxu0 0.0
        %343 = vmatpush2.msra.mxu0 0.0
        %344 = vmatprep.subr.mxu0 0.0
        %345 = vmatpush2.msra.mxu0 0.0
        %346 = vmatprep.subr.mxu0 0.0
        %347 = vmatpush2.msra.mxu0 0.0
        %348 = vmatprep.subr.mxu0 0.0
        %349 = vmatpush2.msra.mxu0 0.0
        %350 = vmatprep.subr.mxu0 0.0
        %351 = vmatpush2.msra.mxu0 0.0
        %352 = vmatprep.subr.mxu0 0.0
        %353 = vmatpush2.msra.mxu0 0.0
        %354 = vmatprep.subr.mxu0 0.0
        %355 = vmatpush2.msra.mxu0 0.0
        %356 = vmatprep.subr.mxu0 0.0
        %357 = vmatpush2.msra.mxu0 0.0
        %358 = vmatprep.subr.mxu0 0.0
        %359 = vmatpush2.msra.mxu0 0.0
        %360 = vmatprep.mubr.f32.mxu0 0.0
        %361 = vmatmul.mubr.f32.gmra.mxu0 %v281
        %v362 = vpop.f32.mrf.mxu0
        %v363 = vadd.f32 0.0, %v362
        %v364 = vpop.f32.mrf.mxu0
        %365 = vmatprep.mubr.f32.mxu0 0.0
        %366 = vmatmul.mubr.f32.gmra.mxu0 %v284
        %v367 = vpop.f32.mrf.mxu0
        %v368 = vadd.f32 0.0, %v367
        %v369 = vpop.f32.mrf.mxu0
        %370 = vmatprep.mubr.f32.mxu0 0.0
        %371 = vmatmul.mubr.f32.gmra.mxu0 %v287
        %v372 = vpop.f32.mrf.mxu0
        %v373 = vadd.f32 0.0, %v372
        %v374 = vpop.f32.mrf.mxu0
        %375 = vmatprep.mubr.f32.mxu0 0.0
        %376 = vmatmul.mubr.f32.gmra.mxu0 %v290
        %v377 = vpop.f32.mrf.mxu0
        %v378 = vadd.f32 0.0, %v377
        %v379 = vpop.f32.mrf.mxu0
        %380 = vdwg.mxu0
        %381 = vst [vmem:[%s238] sm:$0xff] %v363
        %382 = vst [vmem:[%s238 + $0x8] sm:$0xff] %v368
        %383 = vst [vmem:[%s238 + $0x10] sm:$0xff] %v373
        %384 = vst [vmem:[%s238 + $0x18] sm:$0xff] %v378
        %s385 = sand.u32 %s141, 1
        %s386 = scalar_lea.sflag [#allocation3], %s385
        %s387 = sand.u32 %s141, 1
        %s388 = smul.addr %s387, 32
        %s389 = scalar_lea.vmem [#allocation2], %s388
        // Predicated region
        $region37: #{tpu_custom_call.1} parent=35 // pred_check
          %p390 = pneg %p151
        $region38: #{tpu_custom_call.1} parent=35 // pred_check_branch
          %392 = sbr.rel (%p390) target = $region40
        $region39: #{tpu_custom_call.1} parent=35 // pred_region
          %s394 = ssub.s32 512, 512
          %395 = vsyncadd %s386, %s394
          %s396 = smul.addr %s22, 8
          %s397 = sadd.s32 %s23, %s396
          %s398 = smul.addr %s397, 128
          %s399 = scalar_lea.hbm %s4, %s398
          %s400 = sshll.u32 %s389, 4
          %s401 = int_to_ptr.vmem [resolvable:$true] %s400
          %406 = dma.vmem_to_hbm [thread:$0]  %s401, 512, %s399, %s386, 128, 256, 8
        $region40: #{tpu_custom_call.1} parent=35 // pred_fallthru
          _
      $region36: #{tpu_custom_call.1} parent=5 // pred_fallthru
        _
      %p407 = scmp.le.s32.totalorder 2, %s13
      // Predicated region
      $region41: #{tpu_custom_call.1} parent=5 // pred_check
        %p408 = pneg %p407
      $region42: #{tpu_custom_call.1} parent=5 // pred_check_branch
        %410 = sbr.rel (%p408) target = $region44
      $region43: #{tpu_custom_call.1} parent=5 // pred_region
        %s411 = ssub.s32 %s13, 2
        // Predicated region
        $region45: #{tpu_custom_call.1} parent=43 // pred_check
          %p412 = pneg %p157
        $region46: #{tpu_custom_call.1} parent=43 // pred_check_branch
          %414 = sbr.rel (%p412) target = $region48
        $region47: #{tpu_custom_call.1} parent=43 // pred_region
          %s415 = sand.u32 %s142, 1
          %s416 = scalar_lea.sflag [#allocation3], %s415
          %s417 = sand.u32 %s142, 1
          %s418 = smul.addr %s417, 32
          %s419 = scalar_lea.vmem [#allocation2], %s418
          %420 = dma.done %s416, 512
        $region48: #{tpu_custom_call.1} parent=43 // pred_fallthru
          _
      $region44: #{tpu_custom_call.1} parent=5 // pred_fallthru
        _
    $region6: #{tpu_custom_call.1} parent=1 // loop_footer
      %s17 = sadd.s32 1, %s13
    $region7: #{tpu_custom_call.1} parent=1 // loop_footer_branch
      %12 = sbr.rel target = $region3
    $region8: #{tpu_custom_call.1} parent=1 // loop_exit
      _
    %421 = vsyncpa [#allocation3], 1
    %s422 = scalar_lea.sflag [#allocation3], 1
    %423 = vsyncpa %s422, 1

</llo_original>
